<compile_context>
chip_gen: v5e
topology: v5e:2x2
jax: 0.10.0
libtpu: 0.0.40
codegen_flags: <defaults>
</compile_context>

<pallas_src>
import functools

import jax
import jax.numpy as jnp
from jax.experimental import pallas as pl
from jax.experimental.pallas import tpu as pltpu

IN_DIM = 10
H1 = 64
H2 = 256
OUT_DIM = 784          # 28 * 28
OUT_PAD = 896          # 7 * 128 -> lane-dense padded fc3 width


def _leaky_relu(x, slope=0.01):
    return jnp.where(x > 0, x, slope * x)


def _round_up(n, m):
    return ((n + m - 1) // m) * m


def generator_kernel(x_ref, w1_ref, b1_ref, w2_ref, b2_ref, w3_ref, b3_ref,
                     o_ref):
    # One batch tile per grid step. Weight blocks are grid-invariant so they
    # remain resident in VMEM across iterations.
    x = x_ref[...]

    h1 = jnp.dot(x, w1_ref[...], preferred_element_type=jnp.float32)
    h1 = _leaky_relu(h1 + b1_ref[...])

    h2 = jnp.dot(h1, w2_ref[...], preferred_element_type=jnp.float32)
    h2 = _leaky_relu(h2 + b2_ref[...])

    h3 = jnp.dot(h2, w3_ref[...], preferred_element_type=jnp.float32)
    h3 = h3 + b3_ref[...]

    o_ref[...] = jnp.tanh(h3)


@functools.partial(jax.jit, static_argnames=("tb",))
def conditional_generator(x, params, *, tb=512):
    """x: (B, 10) float32 -> (B, 1, 28, 28) float32."""
    w1, b1, w2, b2, w3, b3 = params
    B = x.shape[0]

    # Pad fc3 to a lane-dense 896-wide output. Zero columns -> tanh(0) = 0,
    # sliced off before the (28, 28) reshape.
    w3p = jnp.pad(w3, ((0, 0), (0, OUT_PAD - OUT_DIM)))
    b3p = jnp.pad(b3, ((0, 0), (0, OUT_PAD - OUT_DIM)))

    # Batch tile: multiple of 8 (sublane), capped at tb; pad B so every tile
    # is full (no masked remainder tile).
    tile_b = min(tb, _round_up(B, 8))
    b_pad = _round_up(B, tile_b)
    if b_pad != B:
        x = jnp.pad(x, ((0, b_pad - B), (0, 0)))
    grid = (b_pad // tile_b,)

    flops = 2 * b_pad * (IN_DIM * H1 + H1 * H2 + H2 * OUT_PAD)
    transcendentals = b_pad * OUT_PAD
    bytes_accessed = 4 * (
        b_pad * IN_DIM + b_pad * OUT_PAD
        + IN_DIM * H1 + H1 + H1 * H2 + H2 + H2 * OUT_PAD + OUT_PAD)

    flat = pl.pallas_call(
        generator_kernel,
        out_shape=jax.ShapeDtypeStruct((b_pad, OUT_PAD), jnp.float32),
        grid=grid,
        in_specs=[
            pl.BlockSpec((tile_b, IN_DIM), lambda i: (i, 0)),   # x tile
            pl.BlockSpec((IN_DIM, H1), lambda i: (0, 0)),       # w1 (resident)
            pl.BlockSpec((1, H1), lambda i: (0, 0)),            # b1
            pl.BlockSpec((H1, H2), lambda i: (0, 0)),           # w2
            pl.BlockSpec((1, H2), lambda i: (0, 0)),            # b2
            pl.BlockSpec((H2, OUT_PAD), lambda i: (0, 0)),      # w3 (padded)
            pl.BlockSpec((1, OUT_PAD), lambda i: (0, 0)),       # b3 (padded)
        ],
        out_specs=pl.BlockSpec((tile_b, OUT_PAD), lambda i: (i, 0)),
        compiler_params=pltpu.CompilerParams(
            dimension_semantics=("parallel",)),
        cost_estimate=pl.CostEstimate(
            flops=flops,
            transcendentals=transcendentals,
            bytes_accessed=bytes_accessed),
    )(x, w1, b1, w2, b2, w3p, b3p)

    # Slice off batch / lane padding, then metadata-only reshape to NCHW.
    out = flat[:B, :OUT_DIM]
    return out.reshape(B, 28, 28)[:, None, :, :]


def init_params(key):
    """Deterministic init mimicking PyTorch's default Linear init
    (uniform(-1/sqrt(fan_in), 1/sqrt(fan_in)))."""
    dims = [(IN_DIM, H1), (H1, H2), (H2, OUT_DIM)]
    params = []
    for (fan_in, fan_out) in dims:
        key, kw, kb = jax.random.split(key, 3)
        bound = 1.0 / jnp.sqrt(float(fan_in))
        w = jax.random.uniform(kw, (fan_in, fan_out), jnp.float32,
                               minval=-bound, maxval=bound)
        b = jax.random.uniform(kb, (1, fan_out), jnp.float32,
                               minval=-bound, maxval=bound)
        params.extend([w, b])
    return tuple(params)


def reference(x, params):
    """Plain-JAX reference for sanity checking."""
    w1, b1, w2, b2, w3, b3 = params
    h = _leaky_relu(x @ w1 + b1)
    h = _leaky_relu(h @ w2 + b2)
    h = jnp.tanh(h @ w3 + b3)
    return h.reshape(x.shape[0], 1, 28, 28)


if __name__ == "__main__":
    key = jax.random.PRNGKey(0)
    key, kx = jax.random.split(key)

    B = 2
    x = jax.random.normal(kx, (B, IN_DIM), jnp.float32)
    params = init_params(key)

    out = conditional_generator(x, params)
    out = jax.block_until_ready(out)

    assert out.shape == (B, 1, 28, 28), out.shape
    ref = reference(x, params)
    assert jnp.allclose(out, ref, atol=1e-5, rtol=1e-5), "mismatch vs reference"

    print("KERNEL_OK")
</pallas_src>

<mosaic_0001>
module attributes {stable_mosaic.version = 11 : i64} {
  func.func @generator_kernel(%arg0: i32, %arg1: memref<8x10xf32, #tpu.memory_space<vmem>>, %arg2: memref<10x64xf32, #tpu.memory_space<vmem>>, %arg3: memref<1x64xf32, #tpu.memory_space<vmem>>, %arg4: memref<64x256xf32, #tpu.memory_space<vmem>>, %arg5: memref<1x256xf32, #tpu.memory_space<vmem>>, %arg6: memref<256x896xf32, #tpu.memory_space<vmem>>, %arg7: memref<1x896xf32, #tpu.memory_space<vmem>>, %arg8: memref<8x896xf32, #tpu.memory_space<vmem>>) attributes {dimension_semantics = [#tpu.dimension_semantics<parallel>], iteration_bounds = array<i64: 1>, scalar_prefetch = 0 : i64, scratch_operands = 0 : i64, tpu.core_type = #tpu.core_type<tc>, window_params = [{transform_indices = @transform_0, window_bounds = array<i64: 8, 10>}, {pipeline_mode = #tpu.pipeline_mode<synchronous>, transform_indices = @transform_1, window_bounds = array<i64: 10, 64>}, {pipeline_mode = #tpu.pipeline_mode<synchronous>, transform_indices = @transform_2, window_bounds = array<i64: 1, 64>}, {pipeline_mode = #tpu.pipeline_mode<synchronous>, transform_indices = @transform_3, window_bounds = array<i64: 64, 256>}, {pipeline_mode = #tpu.pipeline_mode<synchronous>, transform_indices = @transform_4, window_bounds = array<i64: 1, 256>}, {pipeline_mode = #tpu.pipeline_mode<synchronous>, transform_indices = @transform_5, window_bounds = array<i64: 256, 896>}, {pipeline_mode = #tpu.pipeline_mode<synchronous>, transform_indices = @transform_6, window_bounds = array<i64: 1, 896>}, {transform_indices = @transform_7, window_bounds = array<i64: 8, 896>}]} {
    %c0 = arith.constant 0 : index
    %c0_0 = arith.constant 0 : index
    %0 = vector.load %arg1[%c0, %c0_0] : memref<8x10xf32, #tpu.memory_space<vmem>>, vector<8x10xf32>
    %c0_1 = arith.constant 0 : index
    %c0_2 = arith.constant 0 : index
    %1 = vector.load %arg2[%c0_1, %c0_2] : memref<10x64xf32, #tpu.memory_space<vmem>>, vector<10x64xf32>
    %cst = arith.constant dense<0.000000e+00> : vector<8x64xf32>
    %2 = tpu.matmul %0, %1, %cst {dimension_numbers = #tpu.dot_dimension_numbers<[1], [0], [0], [1], [0, 0, 1, 1], [], []>} : vector<8x10xf32>, vector<10x64xf32>, vector<8x64xf32> -> vector<8x64xf32>
    %c0_3 = arith.constant 0 : index
    %c0_4 = arith.constant 0 : index
    %3 = vector.load %arg3[%c0_3, %c0_4] : memref<1x64xf32, #tpu.memory_space<vmem>>, vector<1x64xf32>
    %4 = vector.broadcast %3 : vector<1x64xf32> to vector<8x64xf32>
    %5 = arith.addf %2, %4 : vector<8x64xf32>
    %cst_5 = arith.constant 0.000000e+00 : f32
    %6 = vector.broadcast %cst_5 : f32 to vector<8x64xf32>
    %7 = arith.cmpf ogt, %5, %6 : vector<8x64xf32>
    %cst_6 = arith.constant 0.00999999977 : f32
    %8 = vector.broadcast %cst_6 : f32 to vector<8x64xf32>
    %9 = arith.mulf %8, %5 : vector<8x64xf32>
    %10 = arith.select %7, %5, %9 : vector<8x64xi1>, vector<8x64xf32>
    %c0_7 = arith.constant 0 : index
    %c0_8 = arith.constant 0 : index
    %11 = vector.load %arg4[%c0_7, %c0_8] : memref<64x256xf32, #tpu.memory_space<vmem>>, vector<64x256xf32>
    %cst_9 = arith.constant dense<0.000000e+00> : vector<8x256xf32>
    %12 = tpu.matmul %10, %11, %cst_9 {dimension_numbers = #tpu.dot_dimension_numbers<[1], [0], [0], [1], [0, 0, 1, 1], [], []>} : vector<8x64xf32>, vector<64x256xf32>, vector<8x256xf32> -> vector<8x256xf32>
    %c0_10 = arith.constant 0 : index
    %c0_11 = arith.constant 0 : index
    %13 = vector.load %arg5[%c0_10, %c0_11] : memref<1x256xf32, #tpu.memory_space<vmem>>, vector<1x256xf32>
    %14 = vector.broadcast %13 : vector<1x256xf32> to vector<8x256xf32>
    %15 = arith.addf %12, %14 : vector<8x256xf32>
    %cst_12 = arith.constant 0.000000e+00 : f32
    %16 = vector.broadcast %cst_12 : f32 to vector<8x256xf32>
    %17 = arith.cmpf ogt, %15, %16 : vector<8x256xf32>
    %cst_13 = arith.constant 0.00999999977 : f32
    %18 = vector.broadcast %cst_13 : f32 to vector<8x256xf32>
    %19 = arith.mulf %18, %15 : vector<8x256xf32>
    %20 = arith.select %17, %15, %19 : vector<8x256xi1>, vector<8x256xf32>
    %c0_14 = arith.constant 0 : index
    %c0_15 = arith.constant 0 : index
    %21 = vector.load %arg6[%c0_14, %c0_15] : memref<256x896xf32, #tpu.memory_space<vmem>>, vector<256x896xf32>
    %cst_16 = arith.constant dense<0.000000e+00> : vector<8x896xf32>
    %22 = tpu.matmul %20, %21, %cst_16 {dimension_numbers = #tpu.dot_dimension_numbers<[1], [0], [0], [1], [0, 0, 1, 1], [], []>} : vector<8x256xf32>, vector<256x896xf32>, vector<8x896xf32> -> vector<8x896xf32>
    %c0_17 = arith.constant 0 : index
    %c0_18 = arith.constant 0 : index
    %23 = vector.load %arg7[%c0_17, %c0_18] : memref<1x896xf32, #tpu.memory_space<vmem>>, vector<1x896xf32>
    %24 = vector.broadcast %23 : vector<1x896xf32> to vector<8x896xf32>
    %25 = arith.addf %22, %24 : vector<8x896xf32>
    %26 = math.tanh %25 : vector<8x896xf32>
    %c0_19 = arith.constant 0 : index
    %c0_20 = arith.constant 0 : index
    %27 = vector.load %arg8[%c0_19, %c0_20] : memref<8x896xf32, #tpu.memory_space<vmem>>, vector<8x896xf32>
    tpu.vector_store %arg8[%c0_19, %c0_20], %26 {strides = array<i32>} : memref<8x896xf32, #tpu.memory_space<vmem>>, vector<8x896xf32>,
    return
  }
  func.func @transform_0(%arg0: i32) -> (i32, i32) {
    %c0_i32 = arith.constant 0 : i32
    %c0_i32_0 = arith.constant 0 : i32
    return %arg0, %c0_i32 : i32, i32
  }
  func.func @transform_1(%arg0: i32) -> (i32, i32) {
    %c0_i32 = arith.constant 0 : i32
    %c0_i32_0 = arith.constant 0 : i32
    %c0_i32_1 = arith.constant 0 : i32
    return %c0_i32, %c0_i32_0 : i32, i32
  }
  func.func @transform_2(%arg0: i32) -> (i32, i32) {
    %c0_i32 = arith.constant 0 : i32
    %c0_i32_0 = arith.constant 0 : i32
    %c0_i32_1 = arith.constant 0 : i32
    return %c0_i32, %c0_i32_0 : i32, i32
  }
  func.func @transform_3(%arg0: i32) -> (i32, i32) {
    %c0_i32 = arith.constant 0 : i32
    %c0_i32_0 = arith.constant 0 : i32
    %c0_i32_1 = arith.constant 0 : i32
    return %c0_i32, %c0_i32_0 : i32, i32
  }
  func.func @transform_4(%arg0: i32) -> (i32, i32) {
    %c0_i32 = arith.constant 0 : i32
    %c0_i32_0 = arith.constant 0 : i32
    %c0_i32_1 = arith.constant 0 : i32
    return %c0_i32, %c0_i32_0 : i32, i32
  }
  func.func @transform_5(%arg0: i32) -> (i32, i32) {
    %c0_i32 = arith.constant 0 : i32
    %c0_i32_0 = arith.constant 0 : i32
    %c0_i32_1 = arith.constant 0 : i32
    return %c0_i32, %c0_i32_0 : i32, i32
  }
  func.func @transform_6(%arg0: i32) -> (i32, i32) {
    %c0_i32 = arith.constant 0 : i32
    %c0_i32_0 = arith.constant 0 : i32
    %c0_i32_1 = arith.constant 0 : i32
    return %c0_i32, %c0_i32_0 : i32, i32
  }
  func.func @transform_7(%arg0: i32) -> (i32, i32) {
    %c0_i32 = arith.constant 0 : i32
    %c0_i32_0 = arith.constant 0 : i32
    return %arg0, %c0_i32 : i32, i32
  }
}

</mosaic_0001>

<llo_original>
// kernel: conditional_generator.1
$region0: #{conditional_generator.1}
  #allocation0 [shape = 'u32[]', space=smem, size = 0x4, offset = 0x4, fixed_abs, tag = 'smem constant byte address 0x4 - core index']
  #allocation1 [shape = 'u32[72,128]{1,0:T(1,128)}', space=vmem, size = 0x9000, scoped, tag = 'internal scratch']
  %s0 = inlined_call_operand.vmem [shape: f32[8,10], index: 0, kind: input, shape index: {}]
  %s1 = inlined_call_operand.vmem [shape: f32[10,64], index: 1, kind: input, shape index: {}]
  %s2 = inlined_call_operand.vmem [shape: f32[1,64], index: 2, kind: input, shape index: {}]
  %s3 = inlined_call_operand.vmem [shape: f32[64,256], index: 3, kind: input, shape index: {}]
  %s4 = inlined_call_operand.vmem [shape: f32[1,256], index: 4, kind: input, shape index: {}]
  %s5 = inlined_call_operand.vmem [shape: f32[256,896], index: 5, kind: input, shape index: {}]
  %s6 = inlined_call_operand.vmem [shape: f32[1,896], index: 6, kind: input, shape index: {}]
  %s7 = inlined_call_operand.vmem [shape: f32[8,896], index: 7, kind: output, shape index: {}]
  %s8 = sld [smem:[#allocation0]]
  $region38: #{conditional_generator.1} parent=0
    _
  %s10 = ssub.s32 1, %s8
  %s11 = scalar_select 0, %s10, %s8
  // Predicated region
  $region2: #{conditional_generator.1} parent=0 // pred_check
    _
  $region3: #{conditional_generator.1} parent=0 // pred_check_branch
    %13 = sbr.rel (0) target = $region5
  $region4: #{conditional_generator.1} parent=0 // pred_region
    _
  $region5: #{conditional_generator.1} parent=0 // pred_fallthru
    _
  // Predicated region
  $region6: #{conditional_generator.1} parent=0 // pred_check
    _
  $region7: #{conditional_generator.1} parent=0 // pred_check_branch
    %15 = sbr.rel (0) target = $region9
  $region8: #{conditional_generator.1} parent=0 // pred_region
    _
  $region9: #{conditional_generator.1} parent=0 // pred_fallthru
    _
  // Predicated region
  $region10: #{conditional_generator.1} parent=0 // pred_check
    _
  $region11: #{conditional_generator.1} parent=0 // pred_check_branch
    %17 = sbr.rel (0) target = $region13
  $region12: #{conditional_generator.1} parent=0 // pred_region
    _
  $region13: #{conditional_generator.1} parent=0 // pred_fallthru
    _
  // Predicated region
  $region14: #{conditional_generator.1} parent=0 // pred_check
    _
  $region15: #{conditional_generator.1} parent=0 // pred_check_branch
    %19 = sbr.rel (0) target = $region17
  $region16: #{conditional_generator.1} parent=0 // pred_region
    _
  $region17: #{conditional_generator.1} parent=0 // pred_fallthru
    _
  // Predicated region
  $region18: #{conditional_generator.1} parent=0 // pred_check
    _
  $region19: #{conditional_generator.1} parent=0 // pred_check_branch
    %21 = sbr.rel (0) target = $region21
  $region20: #{conditional_generator.1} parent=0 // pred_region
    _
  $region21: #{conditional_generator.1} parent=0 // pred_fallthru
    _
  // Predicated region
  $region22: #{conditional_generator.1} parent=0 // pred_check
    _
  $region23: #{conditional_generator.1} parent=0 // pred_check_branch
    %23 = sbr.rel (0) target = $region25
  $region24: #{conditional_generator.1} parent=0 // pred_region
    _
  $region25: #{conditional_generator.1} parent=0 // pred_fallthru
    _
  // Predicated region
  $region26: #{conditional_generator.1} parent=0 // pred_check
    _
  $region27: #{conditional_generator.1} parent=0 // pred_check_branch
    %25 = sbr.rel (0) target = $region29
  $region28: #{conditional_generator.1} parent=0 // pred_region
    _
  $region29: #{conditional_generator.1} parent=0 // pred_fallthru
    _
  %v26 = vld [vmem:[%s0] sm:$0xff]
  %v27 = vld [vmem:[%s1] sm:$0xff]
  %v28 = vld [vmem:[%s1 + $0x8] sm:$0x3]
  %v29 = vld [vmem:[%s2] sm:$0x1]
  %v31 = vperm.slane %v29, 0
  %vm33 = vcmask 80896
  %v35 = vsel %vm33, %v26, 0
  %vm37 = vcmask 1041408
  %v39 = vsel %vm37, %v28, 0
  %41 = vmatpush.msra.mxu0 0.0
  %42 = vmatpush.msra.mxu0 0.0
  %43 = vmatpush.msra.mxu0 0.0
  %44 = vmatpush.msra.mxu0 0.0
  %45 = vmatpush.msra.mxu0 0.0
  %46 = vmatpush.msra.mxu0 0.0
  %47 = vmatpush.msra.mxu0 0.0
  %48 = vmatpush.msra.mxu0 0.0
  %49 = vmatpush.msra.mxu0 0.0
  %50 = vmatpush.msra.mxu0 0.0
  %51 = vmatpush.msra.mxu0 0.0
  %52 = vmatpush.msra.mxu0 0.0
  %53 = vmatpush.msra.mxu0 0.0
  %54 = vmatpush.msra.mxu0 0.0
  %55 = vmatpush.msra.mxu0 %v39
  %56 = vmatpush.msra.mxu0 %v27
  %57 = vmatmul.f32.gmra.mxu0 %v35
  %v58 = vpop.f32.mrf.mxu0
  %v59 = vadd.f32 %v31, %v58
  %60 = vdwg.mxu0
  %vm61 = vcmp.gt.f32.partialorder %v59, 0.0
  %v62 = vmul.f32 %v59, 0.01
  %v63 = vsel %vm61, %v59, %v62
  %v64 = vld [vmem:[%s3] sm:$0xff]
  %v65 = vld [vmem:[%s3 + $0x8] sm:$0xff]
  %v66 = vld [vmem:[%s3 + $0x10] sm:$0xff]
  %v67 = vld [vmem:[%s3 + $0x18] sm:$0xff]
  %v68 = vld [vmem:[%s3 + $0x20] sm:$0xff]
  %v69 = vld [vmem:[%s3 + $0x28] sm:$0xff]
  %v70 = vld [vmem:[%s3 + $0x30] sm:$0xff]
  %v71 = vld [vmem:[%s3 + $0x38] sm:$0xff]
  %v72 = vld [vmem:[%s3 + $0x40] sm:$0xff]
  %v73 = vld [vmem:[%s3 + $0x48] sm:$0xff]
  %v74 = vld [vmem:[%s3 + $0x50] sm:$0xff]
  %v75 = vld [vmem:[%s3 + $0x58] sm:$0xff]
  %v76 = vld [vmem:[%s3 + $0x60] sm:$0xff]
  %v77 = vld [vmem:[%s3 + $0x68] sm:$0xff]
  %v78 = vld [vmem:[%s3 + $0x70] sm:$0xff]
  %v79 = vld [vmem:[%s3 + $0x78] sm:$0xff]
  %v80 = vld [vmem:[%s4] sm:$0x3]
  %v82 = vperm.slane %v80, 0
  %v83 = vperm.slane %v80, 1
  %vm86 = vcmask 523264
  %v88 = vsel %vm86, %v63, 0
  %90 = vmatpush.msra.mxu0 0.0
  %91 = vmatpush.msra.mxu0 0.0
  %92 = vmatpush.msra.mxu0 0.0
  %93 = vmatpush.msra.mxu0 0.0
  %94 = vmatpush.msra.mxu0 0.0
  %95 = vmatpush.msra.mxu0 0.0
  %96 = vmatpush.msra.mxu0 0.0
  %97 = vmatpush.msra.mxu0 0.0
  %98 = vmatpush.msra.mxu0 %v78
  %99 = vmatpush.msra.mxu0 %v76
  %100 = vmatpush.msra.mxu0 %v74
  %101 = vmatpush.msra.mxu0 %v72
  %102 = vmatpush.msra.mxu0 %v70
  %103 = vmatpush.msra.mxu0 %v68
  %104 = vmatpush.msra.mxu0 %v66
  %105 = vmatpush.msra.mxu0 %v64
  %106 = vmatmul.f32.gmra.mxu0 %v88
  %v107 = vpop.f32.mrf.mxu0
  %v108 = vadd.f32 %v82, %v107
  %109 = vdwg.mxu0
  %110 = vmatpush.msra.mxu0 0.0
  %111 = vmatpush.msra.mxu0 0.0
  %112 = vmatpush.msra.mxu0 0.0
  %113 = vmatpush.msra.mxu0 0.0
  %114 = vmatpush.msra.mxu0 0.0
  %115 = vmatpush.msra.mxu0 0.0
  %116 = vmatpush.msra.mxu0 0.0
  %117 = vmatpush.msra.mxu0 0.0
  %118 = vmatpush.msra.mxu0 %v79
  %119 = vmatpush.msra.mxu0 %v77
  %120 = vmatpush.msra.mxu0 %v75
  %121 = vmatpush.msra.mxu0 %v73
  %122 = vmatpush.msra.mxu0 %v71
  %123 = vmatpush.msra.mxu0 %v69
  %124 = vmatpush.msra.mxu0 %v67
  %125 = vmatpush.msra.mxu0 %v65
  %126 = vmatmul.f32.gmra.mxu0 %v88
  %v127 = vpop.f32.mrf.mxu0
  %v128 = vadd.f32 %v83, %v127
  %129 = vdwg.mxu0
  %vm130 = vcmp.gt.f32.partialorder %v108, 0.0
  %vm131 = vcmp.gt.f32.partialorder %v128, 0.0
  %v132 = vmul.f32 %v108, 0.01
  %v133 = vmul.f32 %v128, 0.01
  %v134 = vsel %vm130, %v108, %v132
  %v135 = vsel %vm131, %v128, %v133
  %v136 = vld [vmem:[%s5] sm:$0xff]
  %v137 = vld [vmem:[%s5 + $0x8] sm:$0xff]
  %v138 = vld [vmem:[%s5 + $0x10] sm:$0xff]
  %v139 = vld [vmem:[%s5 + $0x18] sm:$0xff]
  %v140 = vld [vmem:[%s5 + $0x20] sm:$0xff]
  %v141 = vld [vmem:[%s5 + $0x28] sm:$0xff]
  %v142 = vld [vmem:[%s5 + $0x30] sm:$0xff]
  %v143 = vld [vmem:[%s5 + $0x38] sm:$0xff]
  %v144 = vld [vmem:[%s5 + $0x40] sm:$0xff]
  %v145 = vld [vmem:[%s5 + $0x48] sm:$0xff]
  %v146 = vld [vmem:[%s5 + $0x50] sm:$0xff]
  %v147 = vld [vmem:[%s5 + $0x58] sm:$0xff]
  %v148 = vld [vmem:[%s5 + $0x60] sm:$0xff]
  %v149 = vld [vmem:[%s5 + $0x68] sm:$0xff]
  %v150 = vld [vmem:[%s5 + $0x70] sm:$0xff]
  %v151 = vld [vmem:[%s5 + $0x78] sm:$0xff]
  %v152 = vld [vmem:[%s5 + $0x80] sm:$0xff]
  %v153 = vld [vmem:[%s5 + $0x88] sm:$0xff]
  %v154 = vld [vmem:[%s5 + $0x90] sm:$0xff]
  %v155 = vld [vmem:[%s5 + $0x98] sm:$0xff]
  %v156 = vld [vmem:[%s5 + $0xa0] sm:$0xff]
  %v157 = vld [vmem:[%s5 + $0xa8] sm:$0xff]
  %v158 = vld [vmem:[%s5 + $0xb0] sm:$0xff]
  %v159 = vld [vmem:[%s5 + $0xb8] sm:$0xff]
  %v160 = vld [vmem:[%s5 + $0xc0] sm:$0xff]
  %v161 = vld [vmem:[%s5 + $0xc8] sm:$0xff]
  %v162 = vld [vmem:[%s5 + $0xd0] sm:$0xff]
  %v163 = vld [vmem:[%s5 + $0xd8] sm:$0xff]
  %v164 = vld [vmem:[%s5 + $0xe0] sm:$0xff]
  %v165 = vld [vmem:[%s5 + $0xe8] sm:$0xff]
  %v166 = vld [vmem:[%s5 + $0xf0] sm:$0xff]
  %v167 = vld [vmem:[%s5 + $0xf8] sm:$0xff]
  %v168 = vld [vmem:[%s5 + $0x100] sm:$0xff]
  %v169 = vld [vmem:[%s5 + $0x108] sm:$0xff]
  %v170 = vld [vmem:[%s5 + $0x110] sm:$0xff]
  %v171 = vld [vmem:[%s5 + $0x118] sm:$0xff]
  %v172 = vld [vmem:[%s5 + $0x120] sm:$0xff]
  %v173 = vld [vmem:[%s5 + $0x128] sm:$0xff]
  %v174 = vld [vmem:[%s5 + $0x130] sm:$0xff]
  %v175 = vld [vmem:[%s5 + $0x138] sm:$0xff]
  %v176 = vld [vmem:[%s5 + $0x140] sm:$0xff]
  %v177 = vld [vmem:[%s5 + $0x148] sm:$0xff]
  %v178 = vld [vmem:[%s5 + $0x150] sm:$0xff]
  %v179 = vld [vmem:[%s5 + $0x158] sm:$0xff]
  %v180 = vld [vmem:[%s5 + $0x160] sm:$0xff]
  %v181 = vld [vmem:[%s5 + $0x168] sm:$0xff]
  %v182 = vld [vmem:[%s5 + $0x170] sm:$0xff]
  %v183 = vld [vmem:[%s5 + $0x178] sm:$0xff]
  %v184 = vld [vmem:[%s5 + $0x180] sm:$0xff]
  %v185 = vld [vmem:[%s5 + $0x188] sm:$0xff]
  %v186 = vld [vmem:[%s5 + $0x190] sm:$0xff]
  %v187 = vld [vmem:[%s5 + $0x198] sm:$0xff]
  %v188 = vld [vmem:[%s5 + $0x1a0] sm:$0xff]
  %v189 = vld [vmem:[%s5 + $0x1a8] sm:$0xff]
  %v190 = vld [vmem:[%s5 + $0x1b0] sm:$0xff]
  %v191 = vld [vmem:[%s5 + $0x1b8] sm:$0xff]
  %v192 = vld [vmem:[%s5 + $0x1c0] sm:$0xff]
  %v193 = vld [vmem:[%s5 + $0x1c8] sm:$0xff]
  %v194 = vld [vmem:[%s5 + $0x1d0] sm:$0xff]
  %v195 = vld [vmem:[%s5 + $0x1d8] sm:$0xff]
  %v196 = vld [vmem:[%s5 + $0x1e0] sm:$0xff]
  %v197 = vld [vmem:[%s5 + $0x1e8] sm:$0xff]
  %v198 = vld [vmem:[%s5 + $0x1f0] sm:$0xff]
  %v199 = vld [vmem:[%s5 + $0x1f8] sm:$0xff]
  %v200 = vld [vmem:[%s5 + $0x200] sm:$0xff]
  %v201 = vld [vmem:[%s5 + $0x208] sm:$0xff]
  %v202 = vld [vmem:[%s5 + $0x210] sm:$0xff]
  %v203 = vld [vmem:[%s5 + $0x218] sm:$0xff]
  %v204 = vld [vmem:[%s5 + $0x220] sm:$0xff]
  %v205 = vld [vmem:[%s5 + $0x228] sm:$0xff]
  %v206 = vld [vmem:[%s5 + $0x230] sm:$0xff]
  %v207 = vld [vmem:[%s5 + $0x238] sm:$0xff]
  %v208 = vld [vmem:[%s5 + $0x240] sm:$0xff]
  %v209 = vld [vmem:[%s5 + $0x248] sm:$0xff]
  %v210 = vld [vmem:[%s5 + $0x250] sm:$0xff]
  %v211 = vld [vmem:[%s5 + $0x258] sm:$0xff]
  %v212 = vld [vmem:[%s5 + $0x260] sm:$0xff]
  %v213 = vld [vmem:[%s5 + $0x268] sm:$0xff]
  %v214 = vld [vmem:[%s5 + $0x270] sm:$0xff]
  %v215 = vld [vmem:[%s5 + $0x278] sm:$0xff]
  %v216 = vld [vmem:[%s5 + $0x280] sm:$0xff]
  %v217 = vld [vmem:[%s5 + $0x288] sm:$0xff]
  %v218 = vld [vmem:[%s5 + $0x290] sm:$0xff]
  %v219 = vld [vmem:[%s5 + $0x298] sm:$0xff]
  %v220 = vld [vmem:[%s5 + $0x2a0] sm:$0xff]
  %v221 = vld [vmem:[%s5 + $0x2a8] sm:$0xff]
  %v222 = vld [vmem:[%s5 + $0x2b0] sm:$0xff]
  %v223 = vld [vmem:[%s5 + $0x2b8] sm:$0xff]
  %v224 = vld [vmem:[%s5 + $0x2c0] sm:$0xff]
  %v225 = vld [vmem:[%s5 + $0x2c8] sm:$0xff]
  %v226 = vld [vmem:[%s5 + $0x2d0] sm:$0xff]
  %v227 = vld [vmem:[%s5 + $0x2d8] sm:$0xff]
  %v228 = vld [vmem:[%s5 + $0x2e0] sm:$0xff]
  %v229 = vld [vmem:[%s5 + $0x2e8] sm:$0xff]
  %v230 = vld [vmem:[%s5 + $0x2f0] sm:$0xff]
  %v231 = vld [vmem:[%s5 + $0x2f8] sm:$0xff]
  %v232 = vld [vmem:[%s5 + $0x300] sm:$0xff]
  %v233 = vld [vmem:[%s5 + $0x308] sm:$0xff]
  %v234 = vld [vmem:[%s5 + $0x310] sm:$0xff]
  %v235 = vld [vmem:[%s5 + $0x318] sm:$0xff]
  %v236 = vld [vmem:[%s5 + $0x320] sm:$0xff]
  %v237 = vld [vmem:[%s5 + $0x328] sm:$0xff]
  %v238 = vld [vmem:[%s5 + $0x330] sm:$0xff]
  %v239 = vld [vmem:[%s5 + $0x338] sm:$0xff]
  %v240 = vld [vmem:[%s5 + $0x340] sm:$0xff]
  %v241 = vld [vmem:[%s5 + $0x348] sm:$0xff]
  %v242 = vld [vmem:[%s5 + $0x350] sm:$0xff]
  %v243 = vld [vmem:[%s5 + $0x358] sm:$0xff]
  %v244 = vld [vmem:[%s5 + $0x360] sm:$0xff]
  %v245 = vld [vmem:[%s5 + $0x368] sm:$0xff]
  %v246 = vld [vmem:[%s5 + $0x370] sm:$0xff]
  %v247 = vld [vmem:[%s5 + $0x378] sm:$0xff]
  %v248 = vld [vmem:[%s5 + $0x380] sm:$0xff]
  %v249 = vld [vmem:[%s5 + $0x388] sm:$0xff]
  %v250 = vld [vmem:[%s5 + $0x390] sm:$0xff]
  %v251 = vld [vmem:[%s5 + $0x398] sm:$0xff]
  %v252 = vld [vmem:[%s5 + $0x3a0] sm:$0xff]
  %v253 = vld [vmem:[%s5 + $0x3a8] sm:$0xff]
  %v254 = vld [vmem:[%s5 + $0x3b0] sm:$0xff]
  %v255 = vld [vmem:[%s5 + $0x3b8] sm:$0xff]
  %v256 = vld [vmem:[%s5 + $0x3c0] sm:$0xff]
  %v257 = vld [vmem:[%s5 + $0x3c8] sm:$0xff]
  %v258 = vld [vmem:[%s5 + $0x3d0] sm:$0xff]
  %v259 = vld [vmem:[%s5 + $0x3d8] sm:$0xff]
  %v260 = vld [vmem:[%s5 + $0x3e0] sm:$0xff]
  %v261 = vld [vmem:[%s5 + $0x3e8] sm:$0xff]
  %v262 = vld [vmem:[%s5 + $0x3f0] sm:$0xff]
  %v263 = vld [vmem:[%s5 + $0x3f8] sm:$0xff]
  %v264 = vld [vmem:[%s5 + $0x400] sm:$0xff]
  %v265 = vld [vmem:[%s5 + $0x408] sm:$0xff]
  %v266 = vld [vmem:[%s5 + $0x410] sm:$0xff]
  %v267 = vld [vmem:[%s5 + $0x418] sm:$0xff]
  %v268 = vld [vmem:[%s5 + $0x420] sm:$0xff]
  %v269 = vld [vmem:[%s5 + $0x428] sm:$0xff]
  %v270 = vld [vmem:[%s5 + $0x430] sm:$0xff]
  %v271 = vld [vmem:[%s5 + $0x438] sm:$0xff]
  %v272 = vld [vmem:[%s5 + $0x440] sm:$0xff]
  %v273 = vld [vmem:[%s5 + $0x448] sm:$0xff]
  %v274 = vld [vmem:[%s5 + $0x450] sm:$0xff]
  %v275 = vld [vmem:[%s5 + $0x458] sm:$0xff]
  %v276 = vld [vmem:[%s5 + $0x460] sm:$0xff]
  %v277 = vld [vmem:[%s5 + $0x468] sm:$0xff]
  %v278 = vld [vmem:[%s5 + $0x470] sm:$0xff]
  %v279 = vld [vmem:[%s5 + $0x478] sm:$0xff]
  %v280 = vld [vmem:[%s5 + $0x480] sm:$0xff]
  %v281 = vld [vmem:[%s5 + $0x488] sm:$0xff]
  %v282 = vld [vmem:[%s5 + $0x490] sm:$0xff]
  %v283 = vld [vmem:[%s5 + $0x498] sm:$0xff]
  %v284 = vld [vmem:[%s5 + $0x4a0] sm:$0xff]
  %v285 = vld [vmem:[%s5 + $0x4a8] sm:$0xff]
  %v286 = vld [vmem:[%s5 + $0x4b0] sm:$0xff]
  %v287 = vld [vmem:[%s5 + $0x4b8] sm:$0xff]
  %v288 = vld [vmem:[%s5 + $0x4c0] sm:$0xff]
  %v289 = vld [vmem:[%s5 + $0x4c8] sm:$0xff]
  %v290 = vld [vmem:[%s5 + $0x4d0] sm:$0xff]
  %v291 = vld [vmem:[%s5 + $0x4d8] sm:$0xff]
  %v292 = vld [vmem:[%s5 + $0x4e0] sm:$0xff]
  %v293 = vld [vmem:[%s5 + $0x4e8] sm:$0xff]
  %v294 = vld [vmem:[%s5 + $0x4f0] sm:$0xff]
  %v295 = vld [vmem:[%s5 + $0x4f8] sm:$0xff]
  %v296 = vld [vmem:[%s5 + $0x500] sm:$0xff]
  %v297 = vld [vmem:[%s5 + $0x508] sm:$0xff]
  %v298 = vld [vmem:[%s5 + $0x510] sm:$0xff]
  %v299 = vld [vmem:[%s5 + $0x518] sm:$0xff]
  %v300 = vld [vmem:[%s5 + $0x520] sm:$0xff]
  %v301 = vld [vmem:[%s5 + $0x528] sm:$0xff]
  %v302 = vld [vmem:[%s5 + $0x530] sm:$0xff]
  %v303 = vld [vmem:[%s5 + $0x538] sm:$0xff]
  %v304 = vld [vmem:[%s5 + $0x540] sm:$0xff]
  %v305 = vld [vmem:[%s5 + $0x548] sm:$0xff]
  %v306 = vld [vmem:[%s5 + $0x550] sm:$0xff]
  %v307 = vld [vmem:[%s5 + $0x558] sm:$0xff]
  %v308 = vld [vmem:[%s5 + $0x560] sm:$0xff]
  %v309 = vld [vmem:[%s5 + $0x568] sm:$0xff]
  %v310 = vld [vmem:[%s5 + $0x570] sm:$0xff]
  %v311 = vld [vmem:[%s5 + $0x578] sm:$0xff]
  %v312 = vld [vmem:[%s5 + $0x580] sm:$0xff]
  %v313 = vld [vmem:[%s5 + $0x588] sm:$0xff]
  %v314 = vld [vmem:[%s5 + $0x590] sm:$0xff]
  %v315 = vld [vmem:[%s5 + $0x598] sm:$0xff]
  %v316 = vld [vmem:[%s5 + $0x5a0] sm:$0xff]
  %v317 = vld [vmem:[%s5 + $0x5a8] sm:$0xff]
  %v318 = vld [vmem:[%s5 + $0x5b0] sm:$0xff]
  %v319 = vld [vmem:[%s5 + $0x5b8] sm:$0xff]
  %v320 = vld [vmem:[%s5 + $0x5c0] sm:$0xff]
  %v321 = vld [vmem:[%s5 + $0x5c8] sm:$0xff]
  %v322 = vld [vmem:[%s5 + $0x5d0] sm:$0xff]
  %v323 = vld [vmem:[%s5 + $0x5d8] sm:$0xff]
  %v324 = vld [vmem:[%s5 + $0x5e0] sm:$0xff]
  %v325 = vld [vmem:[%s5 + $0x5e8] sm:$0xff]
  %v326 = vld [vmem:[%s5 + $0x5f0] sm:$0xff]
  %v327 = vld [vmem:[%s5 + $0x5f8] sm:$0xff]
  %v328 = vld [vmem:[%s5 + $0x600] sm:$0xff]
  %v329 = vld [vmem:[%s5 + $0x608] sm:$0xff]
  %v330 = vld [vmem:[%s5 + $0x610] sm:$0xff]
  %v331 = vld [vmem:[%s5 + $0x618] sm:$0xff]
  %v332 = vld [vmem:[%s5 + $0x620] sm:$0xff]
  %v333 = vld [vmem:[%s5 + $0x628] sm:$0xff]
  %v334 = vld [vmem:[%s5 + $0x630] sm:$0xff]
  %v335 = vld [vmem:[%s5 + $0x638] sm:$0xff]
  %v336 = vld [vmem:[%s5 + $0x640] sm:$0xff]
  %v337 = vld [vmem:[%s5 + $0x648] sm:$0xff]
  %v338 = vld [vmem:[%s5 + $0x650] sm:$0xff]
  %v339 = vld [vmem:[%s5 + $0x658] sm:$0xff]
  %v340 = vld [vmem:[%s5 + $0x660] sm:$0xff]
  %v341 = vld [vmem:[%s5 + $0x668] sm:$0xff]
  %v342 = vld [vmem:[%s5 + $0x670] sm:$0xff]
  %v343 = vld [vmem:[%s5 + $0x678] sm:$0xff]
  %v344 = vld [vmem:[%s5 + $0x680] sm:$0xff]
  %v345 = vld [vmem:[%s5 + $0x688] sm:$0xff]
  %v346 = vld [vmem:[%s5 + $0x690] sm:$0xff]
  %v347 = vld [vmem:[%s5 + $0x698] sm:$0xff]
  %v348 = vld [vmem:[%s5 + $0x6a0] sm:$0xff]
  %v349 = vld [vmem:[%s5 + $0x6a8] sm:$0xff]
  %v350 = vld [vmem:[%s5 + $0x6b0] sm:$0xff]
  %v351 = vld [vmem:[%s5 + $0x6b8] sm:$0xff]
  %v352 = vld [vmem:[%s5 + $0x6c0] sm:$0xff]
  %v353 = vld [vmem:[%s5 + $0x6c8] sm:$0xff]
  %v354 = vld [vmem:[%s5 + $0x6d0] sm:$0xff]
  %v355 = vld [vmem:[%s5 + $0x6d8] sm:$0xff]
  %v356 = vld [vmem:[%s5 + $0x6e0] sm:$0xff]
  %v357 = vld [vmem:[%s5 + $0x6e8] sm:$0xff]
  %v358 = vld [vmem:[%s5 + $0x6f0] sm:$0xff]
  %v359 = vld [vmem:[%s5 + $0x6f8] sm:$0xff]
  %v360 = vld [vmem:[%s6] sm:$0xff]
  %v362 = vperm.slane %v360, 0
  %v363 = vperm.slane %v360, 1
  %v364 = vperm.slane %v360, 2
  %v365 = vperm.slane %v360, 3
  %v366 = vperm.slane %v360, 4
  %v367 = vperm.slane %v360, 5
  %v368 = vperm.slane %v360, 6
  %376 = vmatpush.msra.mxu0 %v241
  %377 = vmatpush.msra.mxu0 %v234
  %378 = vmatpush.msra.mxu0 %v227
  %379 = vmatpush.msra.mxu0 %v220
  %380 = vmatpush.msra.mxu0 %v213
  %381 = vmatpush.msra.mxu0 %v206
  %382 = vmatpush.msra.mxu0 %v199
  %383 = vmatpush.msra.mxu0 %v192
  %384 = vmatpush.msra.mxu0 %v185
  %385 = vmatpush.msra.mxu0 %v178
  %386 = vmatpush.msra.mxu0 %v171
  %387 = vmatpush.msra.mxu0 %v164
  %388 = vmatpush.msra.mxu0 %v157
  %389 = vmatpush.msra.mxu0 %v150
  %390 = vmatpush.msra.mxu0 %v143
  %391 = vmatpush.msra.mxu0 %v136
  %392 = vmatmul.f32.gmra.mxu0 %v134
  %v393 = vpop.f32.mrf.mxu0
  %v394 = vadd.f32 %v362, %v393
  %395 = vdwg.mxu0
  %396 = vmatpush.msra.mxu0 %v353
  %397 = vmatpush.msra.mxu0 %v346
  %398 = vmatpush.msra.mxu0 %v339
  %399 = vmatpush.msra.mxu0 %v332
  %400 = vmatpush.msra.mxu0 %v325
  %401 = vmatpush.msra.mxu0 %v318
  %402 = vmatpush.msra.mxu0 %v311
  %403 = vmatpush.msra.mxu0 %v304
  %404 = vmatpush.msra.mxu0 %v297
  %405 = vmatpush.msra.mxu0 %v290
  %406 = vmatpush.msra.mxu0 %v283
  %407 = vmatpush.msra.mxu0 %v276
  %408 = vmatpush.msra.mxu0 %v269
  %409 = vmatpush.msra.mxu0 %v262
  %410 = vmatpush.msra.mxu0 %v255
  %411 = vmatpush.msra.mxu0 %v248
  %412 = vmatmul.f32.gmra.mxu0 %v135
  %v413 = vpop.f32.mrf.mxu0
  %v414 = vadd.f32 %v394, %v413
  %415 = vdwg.mxu0
  %416 = vmatpush.msra.mxu0 %v242
  %417 = vmatpush.msra.mxu0 %v235
  %418 = vmatpush.msra.mxu0 %v228
  %419 = vmatpush.msra.mxu0 %v221
  %420 = vmatpush.msra.mxu0 %v214
  %421 = vmatpush.msra.mxu0 %v207
  %422 = vmatpush.msra.mxu0 %v200
  %423 = vmatpush.msra.mxu0 %v193
  %424 = vmatpush.msra.mxu0 %v186
  %425 = vmatpush.msra.mxu0 %v179
  %426 = vmatpush.msra.mxu0 %v172
  %427 = vmatpush.msra.mxu0 %v165
  %428 = vmatpush.msra.mxu0 %v158
  %429 = vmatpush.msra.mxu0 %v151
  %430 = vmatpush.msra.mxu0 %v144
  %431 = vmatpush.msra.mxu0 %v137
  %432 = vmatmul.f32.gmra.mxu0 %v134
  %v433 = vpop.f32.mrf.mxu0
  %v434 = vadd.f32 %v363, %v433
  %435 = vdwg.mxu0
  %436 = vmatpush.msra.mxu0 %v354
  %437 = vmatpush.msra.mxu0 %v347
  %438 = vmatpush.msra.mxu0 %v340
  %439 = vmatpush.msra.mxu0 %v333
  %440 = vmatpush.msra.mxu0 %v326
  %441 = vmatpush.msra.mxu0 %v319
  %442 = vmatpush.msra.mxu0 %v312
  %443 = vmatpush.msra.mxu0 %v305
  %444 = vmatpush.msra.mxu0 %v298
  %445 = vmatpush.msra.mxu0 %v291
  %446 = vmatpush.msra.mxu0 %v284
  %447 = vmatpush.msra.mxu0 %v277
  %448 = vmatpush.msra.mxu0 %v270
  %449 = vmatpush.msra.mxu0 %v263
  %450 = vmatpush.msra.mxu0 %v256
  %451 = vmatpush.msra.mxu0 %v249
  %452 = vmatmul.f32.gmra.mxu0 %v135
  %v453 = vpop.f32.mrf.mxu0
  %v454 = vadd.f32 %v434, %v453
  %455 = vdwg.mxu0
  %456 = vmatpush.msra.mxu0 %v243
  %457 = vmatpush.msra.mxu0 %v236
  %458 = vmatpush.msra.mxu0 %v229
  %459 = vmatpush.msra.mxu0 %v222
  %460 = vmatpush.msra.mxu0 %v215
  %461 = vmatpush.msra.mxu0 %v208
  %462 = vmatpush.msra.mxu0 %v201
  %463 = vmatpush.msra.mxu0 %v194
  %464 = vmatpush.msra.mxu0 %v187
  %465 = vmatpush.msra.mxu0 %v180
  %466 = vmatpush.msra.mxu0 %v173
  %467 = vmatpush.msra.mxu0 %v166
  %468 = vmatpush.msra.mxu0 %v159
  %469 = vmatpush.msra.mxu0 %v152
  %470 = vmatpush.msra.mxu0 %v145
  %471 = vmatpush.msra.mxu0 %v138
  %472 = vmatmul.f32.gmra.mxu0 %v134
  %v473 = vpop.f32.mrf.mxu0
  %v474 = vadd.f32 %v364, %v473
  %475 = vdwg.mxu0
  %476 = vmatpush.msra.mxu0 %v355
  %477 = vmatpush.msra.mxu0 %v348
  %478 = vmatpush.msra.mxu0 %v341
  %479 = vmatpush.msra.mxu0 %v334
  %480 = vmatpush.msra.mxu0 %v327
  %481 = vmatpush.msra.mxu0 %v320
  %482 = vmatpush.msra.mxu0 %v313
  %483 = vmatpush.msra.mxu0 %v306
  %484 = vmatpush.msra.mxu0 %v299
  %485 = vmatpush.msra.mxu0 %v292
  %486 = vmatpush.msra.mxu0 %v285
  %487 = vmatpush.msra.mxu0 %v278
  %488 = vmatpush.msra.mxu0 %v271
  %489 = vmatpush.msra.mxu0 %v264
  %490 = vmatpush.msra.mxu0 %v257
  %491 = vmatpush.msra.mxu0 %v250
  %492 = vmatmul.f32.gmra.mxu0 %v135
  %v493 = vpop.f32.mrf.mxu0
  %v494 = vadd.f32 %v474, %v493
  %495 = vdwg.mxu0
  %496 = vmatpush.msra.mxu0 %v244
  %497 = vmatpush.msra.mxu0 %v237
  %498 = vmatpush.msra.mxu0 %v230
  %499 = vmatpush.msra.mxu0 %v223
  %500 = vmatpush.msra.mxu0 %v216
  %501 = vmatpush.msra.mxu0 %v209
  %502 = vmatpush.msra.mxu0 %v202
  %503 = vmatpush.msra.mxu0 %v195
  %504 = vmatpush.msra.mxu0 %v188
  %505 = vmatpush.msra.mxu0 %v181
  %506 = vmatpush.msra.mxu0 %v174
  %507 = vmatpush.msra.mxu0 %v167
  %508 = vmatpush.msra.mxu0 %v160
  %509 = vmatpush.msra.mxu0 %v153
  %510 = vmatpush.msra.mxu0 %v146
  %511 = vmatpush.msra.mxu0 %v139
  %512 = vmatmul.f32.gmra.mxu0 %v134
  %v513 = vpop.f32.mrf.mxu0
  %v514 = vadd.f32 %v365, %v513
  %515 = vdwg.mxu0
  %516 = vmatpush.msra.mxu0 %v356
  %517 = vmatpush.msra.mxu0 %v349
  %518 = vmatpush.msra.mxu0 %v342
  %519 = vmatpush.msra.mxu0 %v335
  %520 = vmatpush.msra.mxu0 %v328
  %521 = vmatpush.msra.mxu0 %v321
  %522 = vmatpush.msra.mxu0 %v314
  %523 = vmatpush.msra.mxu0 %v307
  %524 = vmatpush.msra.mxu0 %v300
  %525 = vmatpush.msra.mxu0 %v293
  %526 = vmatpush.msra.mxu0 %v286
  %527 = vmatpush.msra.mxu0 %v279
  %528 = vmatpush.msra.mxu0 %v272
  %529 = vmatpush.msra.mxu0 %v265
  %530 = vmatpush.msra.mxu0 %v258
  %531 = vmatpush.msra.mxu0 %v251
  %532 = vmatmul.f32.gmra.mxu0 %v135
  %v533 = vpop.f32.mrf.mxu0
  %v534 = vadd.f32 %v514, %v533
  %535 = vdwg.mxu0
  %536 = vmatpush.msra.mxu0 %v245
  %537 = vmatpush.msra.mxu0 %v238
  %538 = vmatpush.msra.mxu0 %v231
  %539 = vmatpush.msra.mxu0 %v224
  %540 = vmatpush.msra.mxu0 %v217
  %541 = vmatpush.msra.mxu0 %v210
  %542 = vmatpush.msra.mxu0 %v203
  %543 = vmatpush.msra.mxu0 %v196
  %544 = vmatpush.msra.mxu0 %v189
  %545 = vmatpush.msra.mxu0 %v182
  %546 = vmatpush.msra.mxu0 %v175
  %547 = vmatpush.msra.mxu0 %v168
  %548 = vmatpush.msra.mxu0 %v161
  %549 = vmatpush.msra.mxu0 %v154
  %550 = vmatpush.msra.mxu0 %v147
  %551 = vmatpush.msra.mxu0 %v140
  %552 = vmatmul.f32.gmra.mxu0 %v134
  %v553 = vpop.f32.mrf.mxu0
  %v554 = vadd.f32 %v366, %v553
  %555 = vdwg.mxu0
  %556 = vmatpush.msra.mxu0 %v357
  %557 = vmatpush.msra.mxu0 %v350
  %558 = vmatpush.msra.mxu0 %v343
  %559 = vmatpush.msra.mxu0 %v336
  %560 = vmatpush.msra.mxu0 %v329
  %561 = vmatpush.msra.mxu0 %v322
  %562 = vmatpush.msra.mxu0 %v315
  %563 = vmatpush.msra.mxu0 %v308
  %564 = vmatpush.msra.mxu0 %v301
  %565 = vmatpush.msra.mxu0 %v294
  %566 = vmatpush.msra.mxu0 %v287
  %567 = vmatpush.msra.mxu0 %v280
  %568 = vmatpush.msra.mxu0 %v273
  %569 = vmatpush.msra.mxu0 %v266
  %570 = vmatpush.msra.mxu0 %v259
  %571 = vmatpush.msra.mxu0 %v252
  %572 = vmatmul.f32.gmra.mxu0 %v135
  %v573 = vpop.f32.mrf.mxu0
  %v574 = vadd.f32 %v554, %v573
  %575 = vdwg.mxu0
  %576 = vmatpush.msra.mxu0 %v246
  %577 = vmatpush.msra.mxu0 %v239
  %578 = vmatpush.msra.mxu0 %v232
  %579 = vmatpush.msra.mxu0 %v225
  %580 = vmatpush.msra.mxu0 %v218
  %581 = vmatpush.msra.mxu0 %v211
  %582 = vmatpush.msra.mxu0 %v204
  %583 = vmatpush.msra.mxu0 %v197
  %584 = vmatpush.msra.mxu0 %v190
  %585 = vmatpush.msra.mxu0 %v183
  %586 = vmatpush.msra.mxu0 %v176
  %587 = vmatpush.msra.mxu0 %v169
  %588 = vmatpush.msra.mxu0 %v162
  %589 = vmatpush.msra.mxu0 %v155
  %590 = vmatpush.msra.mxu0 %v148
  %591 = vmatpush.msra.mxu0 %v141
  %592 = vmatmul.f32.gmra.mxu0 %v134
  %v593 = vpop.f32.mrf.mxu0
  %v594 = vadd.f32 %v367, %v593
  %595 = vdwg.mxu0
  %596 = vmatpush.msra.mxu0 %v358
  %597 = vmatpush.msra.mxu0 %v351
  %598 = vmatpush.msra.mxu0 %v344
  %599 = vmatpush.msra.mxu0 %v337
  %600 = vmatpush.msra.mxu0 %v330
  %601 = vmatpush.msra.mxu0 %v323
  %602 = vmatpush.msra.mxu0 %v316
  %603 = vmatpush.msra.mxu0 %v309
  %604 = vmatpush.msra.mxu0 %v302
  %605 = vmatpush.msra.mxu0 %v295
  %606 = vmatpush.msra.mxu0 %v288
  %607 = vmatpush.msra.mxu0 %v281
  %608 = vmatpush.msra.mxu0 %v274
  %609 = vmatpush.msra.mxu0 %v267
  %610 = vmatpush.msra.mxu0 %v260
  %611 = vmatpush.msra.mxu0 %v253
  %612 = vmatmul.f32.gmra.mxu0 %v135
  %v613 = vpop.f32.mrf.mxu0
  %v614 = vadd.f32 %v594, %v613
  %615 = vdwg.mxu0
  %616 = vmatpush.msra.mxu0 %v247
  %617 = vmatpush.msra.mxu0 %v240
  %618 = vmatpush.msra.mxu0 %v233
  %619 = vmatpush.msra.mxu0 %v226
  %620 = vmatpush.msra.mxu0 %v219
  %621 = vmatpush.msra.mxu0 %v212
  %622 = vmatpush.msra.mxu0 %v205
  %623 = vmatpush.msra.mxu0 %v198
  %624 = vmatpush.msra.mxu0 %v191
  %625 = vmatpush.msra.mxu0 %v184
  %626 = vmatpush.msra.mxu0 %v177
  %627 = vmatpush.msra.mxu0 %v170
  %628 = vmatpush.msra.mxu0 %v163
  %629 = vmatpush.msra.mxu0 %v156
  %630 = vmatpush.msra.mxu0 %v149
  %631 = vmatpush.msra.mxu0 %v142
  %632 = vmatmul.f32.gmra.mxu0 %v134
  %v633 = vpop.f32.mrf.mxu0
  %v634 = vadd.f32 %v368, %v633
  %635 = vdwg.mxu0
  %636 = vmatpush.msra.mxu0 %v359
  %637 = vmatpush.msra.mxu0 %v352
  %638 = vmatpush.msra.mxu0 %v345
  %639 = vmatpush.msra.mxu0 %v338
  %640 = vmatpush.msra.mxu0 %v331
  %641 = vmatpush.msra.mxu0 %v324
  %642 = vmatpush.msra.mxu0 %v317
  %643 = vmatpush.msra.mxu0 %v310
  %644 = vmatpush.msra.mxu0 %v303
  %645 = vmatpush.msra.mxu0 %v296
  %646 = vmatpush.msra.mxu0 %v289
  %647 = vmatpush.msra.mxu0 %v282
  %648 = vmatpush.msra.mxu0 %v275
  %649 = vmatpush.msra.mxu0 %v268
  %650 = vmatpush.msra.mxu0 %v261
  %651 = vmatpush.msra.mxu0 %v254
  %652 = vmatmul.f32.gmra.mxu0 %v135
  %v653 = vpop.f32.mrf.mxu0
  %v654 = vadd.f32 %v634, %v653
  %655 = vdwg.mxu0
  %v656 = vtanh.pop %v414
  %v657 = vtanh.pop %v454
  %v658 = vtanh.pop %v494
  %v659 = vtanh.pop %v534
  %v660 = vtanh.pop %v574
  %v661 = vtanh.pop %v614
  %v662 = vtanh.pop %v654
  %663 = vst [vmem:[%s7] sm:$0xff] %v656
  %664 = vst [vmem:[%s7 + $0x8] sm:$0xff] %v657
  %665 = vst [vmem:[%s7 + $0x10] sm:$0xff] %v658
  %666 = vst [vmem:[%s7 + $0x18] sm:$0xff] %v659
  %667 = vst [vmem:[%s7 + $0x20] sm:$0xff] %v660
  %668 = vst [vmem:[%s7 + $0x28] sm:$0xff] %v661
  %669 = vst [vmem:[%s7 + $0x30] sm:$0xff] %v662
  // Predicated region
  $region30: #{conditional_generator.1} parent=0 // pred_check
    _
  $region31: #{conditional_generator.1} parent=0 // pred_check_branch
    %671 = sbr.rel (0) target = $region33
  $region32: #{conditional_generator.1} parent=0 // pred_region
    _
  $region33: #{conditional_generator.1} parent=0 // pred_fallthru
    _
  // Predicated region
  $region34: #{conditional_generator.1} parent=0 // pred_check
    _
  $region35: #{conditional_generator.1} parent=0 // pred_check_branch
    %673 = sbr.rel (0) target = $region37
  $region36: #{conditional_generator.1} parent=0 // pred_region
    _
  $region37: #{conditional_generator.1} parent=0 // pred_fallthru
    _

</llo_original>
